<compile_context>
chip_gen: v5e
topology: v5e:2x2
jax: 0.10.0
libtpu: 0.0.40
codegen_flags: <defaults>
</compile_context>

<pallas_src>
import math

import jax
import jax.numpy as jnp
from jax.experimental import pallas as pl
from jax.experimental.pallas import tpu as pltpu


# ---------------------------------------------------------------------------
# Tiled, lane-dense VMEM copy (main path: n % 128 == 0)
# ---------------------------------------------------------------------------
def _copy_kernel(x_ref, o_ref):
    o_ref[...] = x_ref[...]


def _copy_plan():
    """(block_bytes, min_grid_steps) per TPU generation.

    8 MiB blocks put the ~0.35 us/grid-step pipeline overhead below ~3% of a
    block's read+write time on v5e/v6e/v7x.  Four double-buffered 8 MiB
    buffers (32 MiB) fit comfortably inside v7x's 64 MiB per-TC VMEM (scoped
    limit capped at 40 MiB below) and trivially inside v5e/v6e's 128 MiB.
    On v7x (2 TensorCores) we additionally require >=2 grid steps so the
    "parallel" grid axis can shard the copy across both cores.
    """
    try:
        kind = jax.devices()[0].device_kind.lower()
    except Exception:  # AOT / cross-compile / interpret: perf-only fallback
        kind = ""
    block_bytes = 8 * 1024 * 1024
    if "v5" in kind or "v6" in kind:
        min_steps = 1          # single TensorCore per chip
    else:
        min_steps = 2          # v7x (2 TCs) and unknown
    return block_bytes, min_steps


def _tiled_copy(flat: jnp.ndarray) -> jnp.ndarray:
    """Lane-dense 2-D tiled identity copy; requires flat.size % 128 == 0."""
    n = flat.shape[0]
    itemsize = flat.dtype.itemsize
    pack = max(1, 4 // itemsize)       # 1 f32 / 2 bf16 / 4 int8-fp8
    sub = 8 * pack                     # dtype-native sublane multiple

    W = 0
    for cand in (2048, 1024, 512, 256, 128):
        if n % cand == 0:
            W = cand
            break
    assert W, "caller guarantees n % 128 == 0"
    rows = n // W
    x2d = flat.reshape(rows, W)

    block_bytes, min_steps = _copy_plan()
    blk_r = max(sub, (block_bytes // (W * itemsize)) // sub * sub)
    if blk_r >= rows:
        # Block would swallow the whole array: on multi-TC chips keep >=2
        # grid steps so the "parallel" axis shards across both TensorCores.
        if min_steps > 1 and rows >= min_steps * sub:
            blk_r = pl.cdiv(pl.cdiv(rows, min_steps), sub) * sub
        else:
            blk_r = rows               # single full-array-dim block is legal
    grid = (pl.cdiv(rows, blk_r),)     # ragged last block is masked by Pallas

    blk_bytes_actual = blk_r * W * itemsize
    vmem_limit = int(min(40 * 1024 * 1024,
                         max(4 * 1024 * 1024, 5 * blk_bytes_actual)))

    out2d = pl.pallas_call(
        _copy_kernel,
        out_shape=jax.ShapeDtypeStruct((rows, W), flat.dtype),
        grid=grid,
        in_specs=[pl.BlockSpec((blk_r, W), lambda i: (i, 0))],
        out_specs=pl.BlockSpec((blk_r, W), lambda i: (i, 0)),
        # NOTE: no input_output_aliases -- aliasing a non-donated caller
        # buffer forces XLA to insert a hidden defensive full copy of the
        # input (doubling HBM traffic).  A fresh output is exactly 2n bytes.
        compiler_params=pltpu.CompilerParams(
            dimension_semantics=("parallel",),
            vmem_limit_bytes=vmem_limit,
        ),
        cost_estimate=pl.CostEstimate(
            flops=0, transcendentals=0, bytes_accessed=2 * n * itemsize),
    )(x2d)
    return out2d.reshape(n)


# ---------------------------------------------------------------------------
# Direct HBM->HBM DMA copy (ragged path: n % 128 != 0)
# ---------------------------------------------------------------------------
def _dma_copy_kernel(x_hbm, o_hbm, sem):
    cp = pltpu.make_async_copy(x_hbm, o_hbm, sem)
    cp.start()
    cp.wait()


def _dma_copy(flat: jnp.ndarray) -> jnp.ndarray:
    """HBM->HBM DMA identity copy for sizes that aren't a multiple of 128.

    Replaces the old jnp.pad(...) + out[:n] fallback (which added two extra
    full HBM passes); traffic stays at exactly 2n bytes and no VMEM staging
    or per-grid-step pipeline overhead is involved.
    """
    # TODO(synk): chunk into a few concurrent DMAs for extra engine overlap
    # on very large ragged buffers.
    n = flat.shape[0]
    return pl.pallas_call(
        _dma_copy_kernel,
        out_shape=jax.ShapeDtypeStruct((n,), flat.dtype),
        in_specs=[pl.BlockSpec(memory_space=pl.ANY)],
        out_specs=pl.BlockSpec(memory_space=pl.ANY),
        scratch_shapes=[pltpu.SemaphoreType.DMA],
        cost_estimate=pl.CostEstimate(
            flops=0, transcendentals=0,
            bytes_accessed=2 * n * flat.dtype.itemsize),
    )(flat)


def _pallas_identity_copy(flat: jnp.ndarray) -> jnp.ndarray:
    n = flat.shape[0]
    if n == 0:
        return flat
    if n % 128 == 0:
        return _tiled_copy(flat)
    return _dma_copy(flat)


# ---------------------------------------------------------------------------
# View module equivalent
# ---------------------------------------------------------------------------
class View:
    """JAX/Pallas equivalent of the PyTorch `View` nn.Module."""

    def resetSize(self, *args):
        if len(args) == 1 and isinstance(args[0], (tuple, list)):
            self.size = tuple(args[0])
        else:
            self.size = tuple(args)
        self.numElements = 1
        inferdim = False
        for szi in self.size:
            if szi >= 0:
                self.numElements *= szi
            else:
                assert szi == -1
                assert not inferdim
                inferdim = True
        return self

    def __init__(self, *args):
        self.resetSize(*args)

    def _resolve_shape(self, total: int):
        if -1 in self.size:
            assert total % self.numElements == 0, "cannot infer -1 dim"
            inferred = total // self.numElements
            return tuple(inferred if s == -1 else s for s in self.size)
        assert total == self.numElements, "shape mismatch for view"
        return self.size

    def forward(self, x: jnp.ndarray) -> jnp.ndarray:
        # NOTE: the true zero-cost equivalent of torch `.view()` is just
        # `x.reshape(target)` (metadata only).  The Pallas copy exists only
        # to route the data path through a kernel; it is roofline-tiled and
        # moves exactly 2n bytes of HBM traffic.
        total = math.prod(x.shape)
        target = self._resolve_shape(total)
        flat = x.reshape(total)              # glue: row-major flatten
        flat = _pallas_identity_copy(flat)   # Pallas data path (identity)
        return flat.reshape(target)          # glue: final shape

    def __call__(self, x):
        return self.forward(x)

    def __repr__(self):
        return "View({})".format(", ".join(map(str, self.size)))


# ---------------------------------------------------------------------------
# Demo / smoke test
# ---------------------------------------------------------------------------
if __name__ == "__main__":
    key = jax.random.PRNGKey(0)
    # NCHW-style input, as the PyTorch module would receive.
    x = jax.random.normal(key, (2, 4, 16, 16), dtype=jnp.float32)

    # Equivalent of torch: View(-1, 64)(x)  -> shape (32, 64)
    view = View(-1, 64)
    fwd = jax.jit(view.forward)
    out = jax.block_until_ready(fwd(x))

    # Correctness vs. plain reshape (what torch .view would produce).
    ref = x.reshape(-1, 64)
    assert out.shape == (32, 64), out.shape
    assert out.dtype == x.dtype
    assert bool(jnp.array_equal(out, ref))

    print("KERNEL_OK")
</pallas_src>

<mosaic_0001>
module attributes {stable_mosaic.version = 11 : i64} {
  func.func @_copy_kernel(%arg0: i32, %arg1: memref<1x2048xf32, #tpu.memory_space<vmem>>, %arg2: memref<1x2048xf32, #tpu.memory_space<vmem>>) attributes {dimension_semantics = [#tpu.dimension_semantics<parallel>], iteration_bounds = array<i64: 1>, scalar_prefetch = 0 : i64, scratch_operands = 0 : i64, tpu.core_type = #tpu.core_type<tc>, window_params = [{transform_indices = @transform_0, window_bounds = array<i64: 1, 2048>}, {transform_indices = @transform_1, window_bounds = array<i64: 1, 2048>}]} {
    %c0 = arith.constant 0 : index
    %c0_0 = arith.constant 0 : index
    %0 = vector.load %arg1[%c0, %c0_0] : memref<1x2048xf32, #tpu.memory_space<vmem>>, vector<1x2048xf32>
    %c0_1 = arith.constant 0 : index
    %c0_2 = arith.constant 0 : index
    %1 = vector.load %arg2[%c0_1, %c0_2] : memref<1x2048xf32, #tpu.memory_space<vmem>>, vector<1x2048xf32>
    tpu.vector_store %arg2[%c0_1, %c0_2], %0 {strides = array<i32>} : memref<1x2048xf32, #tpu.memory_space<vmem>>, vector<1x2048xf32>,
    return
  }
  func.func @transform_0(%arg0: i32) -> (i32, i32) {
    %c0_i32 = arith.constant 0 : i32
    %c0_i32_0 = arith.constant 0 : i32
    return %arg0, %c0_i32 : i32, i32
  }
  func.func @transform_1(%arg0: i32) -> (i32, i32) {
    %c0_i32 = arith.constant 0 : i32
    %c0_i32_0 = arith.constant 0 : i32
    return %arg0, %c0_i32 : i32, i32
  }
}

</mosaic_0001>

<llo_original>
// kernel: forward.1
$region0: #{forward.1}
  #allocation0 [shape = 'u32[]', space=smem, size = 0x4, offset = 0x4, fixed_abs, tag = 'smem constant byte address 0x4 - core index']
  #allocation1 [shape = 'u32[72,128]{1,0:T(1,128)}', space=vmem, size = 0x9000, scoped, tag = 'internal scratch']
  %s0 = inlined_call_operand.vmem [shape: f32[1,2048], index: 0, kind: input, shape index: {}]
  %s1 = inlined_call_operand.vmem [shape: f32[1,2048], index: 1, kind: output, shape index: {}]
  %s2 = sld [smem:[#allocation0]]
  $region14: #{forward.1} parent=0
    _
  %s4 = ssub.s32 1, %s2
  %s5 = scalar_select 0, %s4, %s2
  // Predicated region
  $region2: #{forward.1} parent=0 // pred_check
    _
  $region3: #{forward.1} parent=0 // pred_check_branch
    %7 = sbr.rel (0) target = $region5
  $region4: #{forward.1} parent=0 // pred_region
    _
  $region5: #{forward.1} parent=0 // pred_fallthru
    _
  %v8 = vld [vmem:[%s0] sm:$0xff]
  %v9 = vld [vmem:[%s0 + $0x8] sm:$0xff]
  %10 = vst [vmem:[%s1] sm:$0xff] %v8
  %11 = vst [vmem:[%s1 + $0x8] sm:$0xff] %v9
  // Predicated region
  $region6: #{forward.1} parent=0 // pred_check
    _
  $region7: #{forward.1} parent=0 // pred_check_branch
    %13 = sbr.rel (0) target = $region9
  $region8: #{forward.1} parent=0 // pred_region
    _
  $region9: #{forward.1} parent=0 // pred_fallthru
    _
  // Predicated region
  $region10: #{forward.1} parent=0 // pred_check
    _
  $region11: #{forward.1} parent=0 // pred_check_branch
    %15 = sbr.rel (0) target = $region13
  $region12: #{forward.1} parent=0 // pred_region
    _
  $region13: #{forward.1} parent=0 // pred_fallthru
    _

</llo_original>
